<compile_context>
chip_gen: v5e
topology: v5e:2x2
jax: 0.10.0
libtpu: 0.0.40
codegen_flags: <defaults>
</compile_context>

<pallas_src>
import functools
import math

import jax
import jax.numpy as jnp
from jax import lax
from jax.experimental import pallas as pl
from jax.experimental.pallas import tpu as pltpu


def residual_block_kernel(a_ref, x_ref, wcat_ref, bs_ref, u_ref, o_ref, *,
                          c_pad, dropout_rate, negative_slope):
    n = a_ref.shape[0]
    a = a_ref[...]                         # (N, N) raw adjacency, no self loops
    x = x_ref[...]                         # (N, Cin)

    rows = lax.broadcasted_iota(jnp.int32, (n, n), 0)
    cols = lax.broadcasted_iota(jnp.int32, (n, n), 1)
    a_sl = jnp.where(rows == cols, 1.0, a)           # utils.add_self_loops

    # deg = degree(edge_index[0]); d0 = deg^-1/2 (inf -> 0)
    deg0 = jnp.sum(a_sl, axis=1, keepdims=True)               # (N, 1)
    d0 = jnp.where(deg0 > 0.0, lax.rsqrt(deg0), 0.0)          # (N, 1)

    # First-norm edge weights are w1[i,j] = a_sl[i,j]*d0[i]*d0[j] (never materialized).
    # gcn_norm (improved=True): every node already has a self loop whose weight
    # (d0[i]^2) is KEPT by add_remaining_self_loops, so no 2.0 fill applies.
    # Weighted target degree: deg1[j] = sum_i w1[i,j] = d0[j] * (A_sl^T d0)[j]
    r = lax.dot_general(a_sl, d0, (((0,), (0,)), ((), ())),
                        preferred_element_type=jnp.float32)   # (N, 1) matvec
    deg1 = d0 * r
    d1 = jnp.where(deg1 > 0.0, lax.rsqrt(deg1), 0.0)          # (N, 1)
    s = d0 * d1            # combined per-node symmetric scale: w3[i,j]=a_sl[i,j]*s[i]*s[j]

    # Fused linear: [conv.lin | shortcut] weights in one MXU pass
    xw = jnp.dot(x, wcat_ref[...], preferred_element_type=jnp.float32)  # (N, 2*C_PAD)
    xlin = xw[:, :c_pad]                                      # x @ Wc^T (padded)
    residual = xw[:, c_pad:] + bs_ref[...]                    # x @ Ws^T + bs (padded)
    # GCNConv bias is initialized to zeros -> omitted

    # Aggregation at targets: conv[j,:] = s[j] * sum_i a_sl[i,j] * s[i] * xlin[i,:]
    agg = lax.dot_general(a_sl, s * xlin, (((0,), (0,)), ((), ())),
                          preferred_element_type=jnp.float32)  # (N, C_PAD)
    conv = s * agg

    # BatchNorm1d, training mode (batch stats, gamma=1, beta=0, eps=1e-5)
    mean = jnp.mean(conv, axis=0, keepdims=True)
    var = jnp.mean((conv - mean) ** 2, axis=0, keepdims=True)
    y = (conv - mean) * lax.rsqrt(var + 1e-5)

    # LeakyReLU
    y = jnp.where(y >= 0.0, y, negative_slope * y)

    # Dropout (training). Uniforms come in as an input (see wrapper).
    keep = u_ref[...] >= dropout_rate
    y = jnp.where(keep, y * (1.0 / (1.0 - dropout_rate)), 0.0)

    # residual add + LeakyReLU
    out = y + residual
    o_ref[...] = jnp.where(out >= 0.0, out, negative_slope * out)


def residual_block_forward(x, edge_index, wc, ws, bs, *, dropout_key,
                           dropout_rate=0.1, negative_slope=0.1):
    n, c_in = x.shape
    c_out = wc.shape[0]
    c_pad = max(128, ((c_out + 127) // 128) * 128)    # lane-dense channel dim

    # Glue: edge_index -> dense adjacency (no self loops; kernel adds them).
    adj = jnp.zeros((n, n), jnp.float32).at[edge_index[0], edge_index[1]].set(1.0)

    # Zero-pad output channels to 128 lanes and fuse [conv.lin | shortcut] weights.
    wc_p = jnp.zeros((c_pad, c_in), jnp.float32).at[:c_out].set(wc)
    ws_p = jnp.zeros((c_pad, c_in), jnp.float32).at[:c_out].set(ws)
    wcat = jnp.concatenate([wc_p, ws_p], axis=0).T            # (Cin, 2*C_PAD)
    bs_p = jnp.zeros((1, c_pad), jnp.float32).at[0, :c_out].set(bs)

    # TODO(synk): dropout mask uses jax.random (same Bernoulli(1-p) distribution,
    # does not bit-match torch's RNG stream).
    u = jax.random.uniform(dropout_key, (n, c_pad), jnp.float32)

    kernel = functools.partial(residual_block_kernel, c_pad=c_pad,
                               dropout_rate=dropout_rate,
                               negative_slope=negative_slope)

    out = pl.pallas_call(
        kernel,
        out_shape=jax.ShapeDtypeStruct((n, c_pad), jnp.float32),
        grid=(1,),
        in_specs=[
            pl.BlockSpec((n, n), lambda i: (0, 0)),           # dense adjacency
            pl.BlockSpec((n, c_in), lambda i: (0, 0)),        # node features
            pl.BlockSpec((c_in, 2 * c_pad), lambda i: (0, 0)),  # fused weights
            pl.BlockSpec((1, c_pad), lambda i: (0, 0)),       # shortcut bias (padded)
            pl.BlockSpec((n, c_pad), lambda i: (0, 0)),       # dropout uniforms
        ],
        out_specs=pl.BlockSpec((n, c_pad), lambda i: (0, 0)),
        compiler_params=pltpu.CompilerParams(dimension_semantics=("arbitrary",)),
    )(adj, x, wcat, bs_p, u)
    return out[:, :c_out]


def xavier_uniform(key, shape, gain):
    fan_out, fan_in = shape
    bound = gain * math.sqrt(6.0 / (fan_in + fan_out))
    return jax.random.uniform(key, shape, jnp.float32, -bound, bound)


if __name__ == "__main__":
    N, C_IN, C_OUT = 16, 8, 16          # small graph: 16 nodes, 8 -> 16 channels
    NEG_SLOPE, DROPOUT = 0.1, 0.1

    key = jax.random.PRNGKey(0)
    kx, ka, kw_conv, kw_sc, kdrop = jax.random.split(key, 5)

    # node features
    x = jax.random.normal(kx, (N, C_IN), jnp.float32)

    # random directed graph with no self loops, as an edge_index (2, E)
    a_rand = (jax.random.uniform(ka, (N, N)) < 0.25).astype(jnp.float32)
    a_rand = a_rand * (1.0 - jnp.eye(N, dtype=jnp.float32))
    src, dst = jnp.nonzero(a_rand)
    edge_index = jnp.stack([src, dst]).astype(jnp.int32)

    # deterministic parameter init, matching reset_parameters()
    gain_lrelu = math.sqrt(2.0 / (1.0 + NEG_SLOPE ** 2))   # calculate_gain('leaky_relu', 0.1)
    wc = xavier_uniform(kw_conv, (C_OUT, C_IN), gain_lrelu)   # conv.lin.weight
    ws = xavier_uniform(kw_sc, (C_OUT, C_IN), 1.0)            # shortcut.weight
    bs = jnp.zeros((C_OUT,), jnp.float32)                     # shortcut.bias

    out = residual_block_forward(x, edge_index, wc, ws, bs, dropout_key=kdrop,
                                 dropout_rate=DROPOUT, negative_slope=NEG_SLOPE)
    jax.block_until_ready(out)
    assert out.shape == (N, C_OUT)
    print("KERNEL_OK")
</pallas_src>

<mosaic_0001>
module attributes {stable_mosaic.version = 11 : i64} {
  func.func @residual_block_kernel(%arg0: i32, %arg1: memref<16x16xf32, #tpu.memory_space<vmem>>, %arg2: memref<16x8xf32, #tpu.memory_space<vmem>>, %arg3: memref<8x256xf32, #tpu.memory_space<vmem>>, %arg4: memref<1x128xf32, #tpu.memory_space<vmem>>, %arg5: memref<16x128xf32, #tpu.memory_space<vmem>>, %arg6: memref<16x128xf32, #tpu.memory_space<vmem>>) attributes {dimension_semantics = [#tpu.dimension_semantics<arbitrary>], iteration_bounds = array<i64: 1>, scalar_prefetch = 0 : i64, scratch_operands = 0 : i64, tpu.core_type = #tpu.core_type<tc>, window_params = [{pipeline_mode = #tpu.pipeline_mode<synchronous>, transform_indices = @transform_0, window_bounds = array<i64: 16, 16>}, {pipeline_mode = #tpu.pipeline_mode<synchronous>, transform_indices = @transform_1, window_bounds = array<i64: 16, 8>}, {pipeline_mode = #tpu.pipeline_mode<synchronous>, transform_indices = @transform_2, window_bounds = array<i64: 8, 256>}, {pipeline_mode = #tpu.pipeline_mode<synchronous>, transform_indices = @transform_3, window_bounds = array<i64: 1, 128>}, {pipeline_mode = #tpu.pipeline_mode<synchronous>, transform_indices = @transform_4, window_bounds = array<i64: 16, 128>}, {pipeline_mode = #tpu.pipeline_mode<synchronous>, transform_indices = @transform_5, window_bounds = array<i64: 16, 128>}]} {
    %c0 = arith.constant 0 : index
    %c0_0 = arith.constant 0 : index
    %0 = vector.load %arg1[%c0, %c0_0] : memref<16x16xf32, #tpu.memory_space<vmem>>, vector<16x16xf32>
    %c0_1 = arith.constant 0 : index
    %c0_2 = arith.constant 0 : index
    %1 = vector.load %arg2[%c0_1, %c0_2] : memref<16x8xf32, #tpu.memory_space<vmem>>, vector<16x8xf32>
    %2 = tpu.iota {dimensions = array<i32: 0>} : vector<16x16xi32>
    %3 = tpu.iota {dimensions = array<i32: 1>} : vector<16x16xi32>
    %4 = arith.cmpi eq, %2, %3 : vector<16x16xi32>
    %cst = arith.constant 1.000000e+00 : f32
    %5 = vector.broadcast %cst : f32 to vector<16x16xf32>
    %6 = arith.select %4, %5, %0 : vector<16x16xi1>, vector<16x16xf32>
    %cst_3 = arith.constant dense<0.000000e+00> : vector<16xf32>
    %7 = vector.multi_reduction <add>, %6, %cst_3 [1] : vector<16x16xf32> to vector<16xf32>
    %8 = vector.shape_cast %7 : vector<16xf32> to vector<16x1xf32>
    %cst_4 = arith.constant 0.000000e+00 : f32
    %9 = vector.broadcast %cst_4 : f32 to vector<16x1xf32>
    %10 = arith.cmpf ogt, %8, %9 : vector<16x1xf32>
    %11 = math.rsqrt %8 : vector<16x1xf32>
    %cst_5 = arith.constant 0.000000e+00 : f32
    %12 = vector.broadcast %cst_5 : f32 to vector<16x1xf32>
    %13 = arith.select %10, %11, %12 : vector<16x1xi1>, vector<16x1xf32>
    %cst_6 = arith.constant dense<0.000000e+00> : vector<16x1xf32>
    %14 = tpu.matmul %6, %13, %cst_6 {dimension_numbers = #tpu.dot_dimension_numbers<[0], [0], [1], [1], [0, 1, 1, 1], [], []>} : vector<16x16xf32>, vector<16x1xf32>, vector<16x1xf32> -> vector<16x1xf32>
    %15 = arith.mulf %13, %14 : vector<16x1xf32>
    %cst_7 = arith.constant 0.000000e+00 : f32
    %16 = vector.broadcast %cst_7 : f32 to vector<16x1xf32>
    %17 = arith.cmpf ogt, %15, %16 : vector<16x1xf32>
    %18 = math.rsqrt %15 : vector<16x1xf32>
    %cst_8 = arith.constant 0.000000e+00 : f32
    %19 = vector.broadcast %cst_8 : f32 to vector<16x1xf32>
    %20 = arith.select %17, %18, %19 : vector<16x1xi1>, vector<16x1xf32>
    %21 = arith.mulf %13, %20 : vector<16x1xf32>
    %c0_9 = arith.constant 0 : index
    %c0_10 = arith.constant 0 : index
    %22 = vector.load %arg3[%c0_9, %c0_10] : memref<8x256xf32, #tpu.memory_space<vmem>>, vector<8x256xf32>
    %cst_11 = arith.constant dense<0.000000e+00> : vector<16x256xf32>
    %23 = tpu.matmul %1, %22, %cst_11 {dimension_numbers = #tpu.dot_dimension_numbers<[1], [0], [0], [1], [0, 0, 1, 1], [], []>} : vector<16x8xf32>, vector<8x256xf32>, vector<16x256xf32> -> vector<16x256xf32>
    %24 = vector.extract_strided_slice %23 {offsets = [0, 0], sizes = [16, 128], strides = [1, 1]} : vector<16x256xf32> to vector<16x128xf32>
    %25 = vector.extract_strided_slice %23 {offsets = [0, 128], sizes = [16, 128], strides = [1, 1]} : vector<16x256xf32> to vector<16x128xf32>
    %c0_12 = arith.constant 0 : index
    %c0_13 = arith.constant 0 : index
    %26 = vector.load %arg4[%c0_12, %c0_13] : memref<1x128xf32, #tpu.memory_space<vmem>>, vector<1x128xf32>
    %27 = vector.broadcast %26 : vector<1x128xf32> to vector<16x128xf32>
    %28 = arith.addf %25, %27 : vector<16x128xf32>
    %29 = vector.broadcast %21 : vector<16x1xf32> to vector<16x128xf32>
    %30 = arith.mulf %29, %24 : vector<16x128xf32>
    %cst_14 = arith.constant dense<0.000000e+00> : vector<16x128xf32>
    %31 = tpu.matmul %6, %30, %cst_14 {dimension_numbers = #tpu.dot_dimension_numbers<[0], [0], [1], [1], [0, 1, 1, 1], [], []>} : vector<16x16xf32>, vector<16x128xf32>, vector<16x128xf32> -> vector<16x128xf32>
    %32 = vector.broadcast %21 : vector<16x1xf32> to vector<16x128xf32>
    %33 = arith.mulf %32, %31 : vector<16x128xf32>
    %cst_15 = arith.constant dense<0.000000e+00> : vector<128xf32>
    %34 = vector.multi_reduction <add>, %33, %cst_15 [0] : vector<16x128xf32> to vector<128xf32>
    %35 = vector.shape_cast %34 : vector<128xf32> to vector<1x128xf32>
    %cst_16 = arith.constant 1.600000e+01 : f32
    %36 = vector.broadcast %cst_16 : f32 to vector<1x128xf32>
    %37 = arith.divf %35, %36 : vector<1x128xf32>
    %38 = vector.broadcast %37 : vector<1x128xf32> to vector<16x128xf32>
    %39 = arith.subf %33, %38 : vector<16x128xf32>
    %40 = arith.mulf %39, %39 : vector<16x128xf32>
    %cst_17 = arith.constant dense<0.000000e+00> : vector<128xf32>
    %41 = vector.multi_reduction <add>, %40, %cst_17 [0] : vector<16x128xf32> to vector<128xf32>
    %42 = vector.shape_cast %41 : vector<128xf32> to vector<1x128xf32>
    %cst_18 = arith.constant 1.600000e+01 : f32
    %43 = vector.broadcast %cst_18 : f32 to vector<1x128xf32>
    %44 = arith.divf %42, %43 : vector<1x128xf32>
    %45 = vector.broadcast %37 : vector<1x128xf32> to vector<16x128xf32>
    %46 = arith.subf %33, %45 : vector<16x128xf32>
    %cst_19 = arith.constant 9.99999974E-6 : f32
    %47 = vector.broadcast %cst_19 : f32 to vector<1x128xf32>
    %48 = arith.addf %44, %47 : vector<1x128xf32>
    %49 = math.rsqrt %48 : vector<1x128xf32>
    %50 = vector.broadcast %49 : vector<1x128xf32> to vector<16x128xf32>
    %51 = arith.mulf %46, %50 : vector<16x128xf32>
    %cst_20 = arith.constant 0.000000e+00 : f32
    %52 = vector.broadcast %cst_20 : f32 to vector<16x128xf32>
    %53 = arith.cmpf oge, %51, %52 : vector<16x128xf32>
    %cst_21 = arith.constant 1.000000e-01 : f32
    %54 = vector.broadcast %cst_21 : f32 to vector<16x128xf32>
    %55 = arith.mulf %54, %51 : vector<16x128xf32>
    %56 = arith.select %53, %51, %55 : vector<16x128xi1>, vector<16x128xf32>
    %c0_22 = arith.constant 0 : index
    %c0_23 = arith.constant 0 : index
    %57 = vector.load %arg5[%c0_22, %c0_23] : memref<16x128xf32, #tpu.memory_space<vmem>>, vector<16x128xf32>
    %cst_24 = arith.constant 1.000000e-01 : f32
    %58 = vector.broadcast %cst_24 : f32 to vector<16x128xf32>
    %59 = arith.cmpf oge, %57, %58 : vector<16x128xf32>
    %cst_25 = arith.constant 1.11111116 : f32
    %60 = vector.broadcast %cst_25 : f32 to vector<16x128xf32>
    %61 = arith.mulf %56, %60 : vector<16x128xf32>
    %cst_26 = arith.constant 0.000000e+00 : f32
    %62 = vector.broadcast %cst_26 : f32 to vector<16x128xf32>
    %63 = arith.select %59, %61, %62 : vector<16x128xi1>, vector<16x128xf32>
    %64 = arith.addf %63, %28 : vector<16x128xf32>
    %cst_27 = arith.constant 0.000000e+00 : f32
    %65 = vector.broadcast %cst_27 : f32 to vector<16x128xf32>
    %66 = arith.cmpf oge, %64, %65 : vector<16x128xf32>
    %cst_28 = arith.constant 1.000000e-01 : f32
    %67 = vector.broadcast %cst_28 : f32 to vector<16x128xf32>
    %68 = arith.mulf %67, %64 : vector<16x128xf32>
    %69 = arith.select %66, %64, %68 : vector<16x128xi1>, vector<16x128xf32>
    %c0_29 = arith.constant 0 : index
    %c0_30 = arith.constant 0 : index
    %70 = vector.load %arg6[%c0_29, %c0_30] : memref<16x128xf32, #tpu.memory_space<vmem>>, vector<16x128xf32>
    tpu.vector_store %arg6[%c0_29, %c0_30], %69 {strides = array<i32>} : memref<16x128xf32, #tpu.memory_space<vmem>>, vector<16x128xf32>,
    return
  }
  func.func @transform_0(%arg0: i32) -> (i32, i32) {
    %c0_i32 = arith.constant 0 : i32
    %c0_i32_0 = arith.constant 0 : i32
    %c0_i32_1 = arith.constant 0 : i32
    return %c0_i32, %c0_i32_0 : i32, i32
  }
  func.func @transform_1(%arg0: i32) -> (i32, i32) {
    %c0_i32 = arith.constant 0 : i32
    %c0_i32_0 = arith.constant 0 : i32
    %c0_i32_1 = arith.constant 0 : i32
    return %c0_i32, %c0_i32_0 : i32, i32
  }
  func.func @transform_2(%arg0: i32) -> (i32, i32) {
    %c0_i32 = arith.constant 0 : i32
    %c0_i32_0 = arith.constant 0 : i32
    %c0_i32_1 = arith.constant 0 : i32
    return %c0_i32, %c0_i32_0 : i32, i32
  }
  func.func @transform_3(%arg0: i32) -> (i32, i32) {
    %c0_i32 = arith.constant 0 : i32
    %c0_i32_0 = arith.constant 0 : i32
    %c0_i32_1 = arith.constant 0 : i32
    return %c0_i32, %c0_i32_0 : i32, i32
  }
  func.func @transform_4(%arg0: i32) -> (i32, i32) {
    %c0_i32 = arith.constant 0 : i32
    %c0_i32_0 = arith.constant 0 : i32
    %c0_i32_1 = arith.constant 0 : i32
    return %c0_i32, %c0_i32_0 : i32, i32
  }
  func.func @transform_5(%arg0: i32) -> (i32, i32) {
    %c0_i32 = arith.constant 0 : i32
    %c0_i32_0 = arith.constant 0 : i32
    %c0_i32_1 = arith.constant 0 : i32
    return %c0_i32, %c0_i32_0 : i32, i32
  }
}

</mosaic_0001>

<llo_original>
// kernel: tpu_custom_call.1
$region0: #{tpu_custom_call.1}
  #allocation0 [shape = 'u32[]', space=smem, size = 0x4, offset = 0x4, fixed_abs, tag = 'smem constant byte address 0x4 - core index']
  #allocation1 [shape = 'u32[72,128]{1,0:T(1,128)}', space=vmem, size = 0x9000, scoped, tag = 'internal scratch']
  %s0 = inlined_call_operand.vmem [shape: f32[16,16], index: 0, kind: input, shape index: {}]
  %s1 = inlined_call_operand.vmem [shape: f32[16,8], index: 1, kind: input, shape index: {}]
  %s2 = inlined_call_operand.hbm [shape: f32[8,256], index: 2, kind: input, shape index: {}]
  %s3 = inlined_call_operand.vmem [shape: f32[1,128], index: 3, kind: input, shape index: {}]
  %s4 = inlined_call_operand.hbm [shape: f32[16,128], index: 4, kind: input, shape index: {}]
  %s5 = inlined_call_operand.hbm [shape: f32[16,128], index: 5, kind: output, shape index: {}]
  %s6 = sld [smem:[#allocation0]]
  $region38: #{tpu_custom_call.1} parent=0
    _
  %s8 = ssub.s32 1, %s6
  %s9 = scalar_select 0, %s8, %s6
  $region1: #{tpu_custom_call.1} parent=0
    #allocation2 [shape = 'u8[8192]{0}', space=vmem, size = 0x2000, scoped, tag = 'input window, operand 2, single buffered']
    #allocation3 [shape = 's32[1]{0}', space=sflag, size = 0x4, scoped, tag = 'scoped memory for tpu_custom_call.1']
    #allocation4 [shape = 's32[1]{0}', space=sflag, size = 0x4, scoped, tag = 'scoped memory for tpu_custom_call.1']
    #allocation5 [shape = 'u8[8192]{0}', space=vmem, size = 0x2000, scoped, tag = 'input window, operand 4, single buffered']
    #allocation6 [shape = 's32[1]{0}', space=sflag, size = 0x4, scoped, tag = 'scoped memory for tpu_custom_call.1']
    #allocation7 [shape = 'u8[8192]{0}', space=vmem, size = 0x2000, scoped, tag = 'output window, operand 0, single buffered']
    %10 = vsyncpa [#allocation3], 0
    %11 = vsyncpa [#allocation6], 0
    %12 = vsyncpa [#allocation4], 0
    // Predicated region
    $region2: #{tpu_custom_call.1} parent=1 // pred_check
      _
    $region3: #{tpu_custom_call.1} parent=1 // pred_check_branch
      %14 = sbr.rel (0) target = $region5
    $region4: #{tpu_custom_call.1} parent=1 // pred_region
      _
    $region5: #{tpu_custom_call.1} parent=1 // pred_fallthru
      _
    // Predicated region
    $region6: #{tpu_custom_call.1} parent=1 // pred_check
      _
    $region7: #{tpu_custom_call.1} parent=1 // pred_check_branch
      %16 = sbr.rel (0) target = $region9
    $region8: #{tpu_custom_call.1} parent=1 // pred_region
      _
    $region9: #{tpu_custom_call.1} parent=1 // pred_fallthru
      _
    // Predicated region
    $region10: #{tpu_custom_call.1} parent=1 // pred_check
      _
    $region11: #{tpu_custom_call.1} parent=1 // pred_check_branch
      %18 = sbr.rel (0) target = $region13
    $region12: #{tpu_custom_call.1} parent=1 // pred_region
      %20 = vsyncadd [#allocation3], 0
      %s22 = sshll.u32 %s2, 4
      %s23 = int_to_ptr.hbm [resolvable:$true] %s22
      %s24 = sshll.u32 [#allocation2], 4
      %s25 = int_to_ptr.vmem [resolvable:$true] %s24
      %27 = dma.hbm_to_vmem [thread:$0]  %s23, 256, %s25, [#allocation3]
    $region13: #{tpu_custom_call.1} parent=1 // pred_fallthru
      _
    // Predicated region
    $region14: #{tpu_custom_call.1} parent=1 // pred_check
      _
    $region15: #{tpu_custom_call.1} parent=1 // pred_check_branch
      %29 = sbr.rel (0) target = $region17
    $region16: #{tpu_custom_call.1} parent=1 // pred_region
      _
    $region17: #{tpu_custom_call.1} parent=1 // pred_fallthru
      _
    // Predicated region
    $region18: #{tpu_custom_call.1} parent=1 // pred_check
      _
    $region19: #{tpu_custom_call.1} parent=1 // pred_check_branch
      %31 = sbr.rel (0) target = $region21
    $region20: #{tpu_custom_call.1} parent=1 // pred_region
      %33 = vsyncadd [#allocation6], 0
      %s34 = sshll.u32 %s4, 4
      %s35 = int_to_ptr.hbm [resolvable:$true] %s34
      %s36 = sshll.u32 [#allocation5], 4
      %s37 = int_to_ptr.vmem [resolvable:$true] %s36
      %42 = dma.hbm_to_vmem [thread:$0]  %s35, 256, %s37, [#allocation6], 128, 128, 8
    $region21: #{tpu_custom_call.1} parent=1 // pred_fallthru
      _
    // Predicated region
    $region22: #{tpu_custom_call.1} parent=1 // pred_check
      _
    $region23: #{tpu_custom_call.1} parent=1 // pred_check_branch
      %44 = sbr.rel (0) target = $region25
    $region24: #{tpu_custom_call.1} parent=1 // pred_region
      %46 = dma.done [#allocation3], 256
    $region25: #{tpu_custom_call.1} parent=1 // pred_fallthru
      _
    // Predicated region
    $region26: #{tpu_custom_call.1} parent=1 // pred_check
      _
    $region27: #{tpu_custom_call.1} parent=1 // pred_check_branch
      %48 = sbr.rel (0) target = $region29
    $region28: #{tpu_custom_call.1} parent=1 // pred_region
      %50 = dma.done [#allocation6], 256
    $region29: #{tpu_custom_call.1} parent=1 // pred_fallthru
      _
    %v51 = vld [vmem:[%s0] sm:$0xff]
    %v52 = vld [vmem:[%s0 + $0x8] sm:$0xff]
    %v53 = vld [vmem:[%s1] sm:$0xff]
    %v54 = vld [vmem:[%s1 + $0x8] sm:$0xff]
    %v55 = vlaneseq
    %v56 = vshrl.u32 %v55, 7
    %v57 = vadd.s32 %v56, 8
    %v58 = vlaneseq
    %v59 = vand.u32 %v58, 127
    %vm60 = vcmp.eq.s32.totalorder %v56, %v59
    %vm61 = vcmp.eq.s32.totalorder %v57, %v59
    %v62 = vsel %vm60, 1.0, %v51
    %v63 = vsel %vm61, 1.0, %v52
    %vm64 = vcmask 130048
    %v65 = vsel %vm64, %v62, 0.0
    %66 = vadd.xlane.f32.xlu0 %v65
    %v67 = vpop.xlane.xlu0 %66
    %v68 = vsel %vm64, %v63, 0.0
    %69 = vadd.xlane.f32.xlu0 %v68
    %v70 = vpop.xlane.xlu0 %69
    %vm71 = vcmp.gt.f32.partialorder %v67, 0.0
    %vm72 = vcmp.gt.f32.partialorder %v70, 0.0
    %v73 = vrsqrt.pop %v67
    %v74 = vmul.f32 %v73, %v67
    %v75 = vmul.f32 %v74, %v73
    %v76 = vmul.f32 0.5, %v75
    %v77 = vsub.f32 1.5, %v76
    %v78 = vmul.f32 %v73, %v77
    %vm79 = vweird.f32 %v67
    %vm80 = vweird.f32 %v73
    %vm81 = vmor %vm79, %vm80
    %v82 = vsel %vm81, %v73, %v78
    %v83 = vrsqrt.pop %v70
    %v84 = vmul.f32 %v83, %v70
    %v85 = vmul.f32 %v84, %v83
    %v86 = vmul.f32 0.5, %v85
    %v87 = vsub.f32 1.5, %v86
    %v88 = vmul.f32 %v83, %v87
    %vm89 = vweird.f32 %v70
    %vm90 = vweird.f32 %v83
    %vm91 = vmor %vm89, %vm90
    %v92 = vsel %vm91, %v83, %v88
    %v93 = vsel %vm71, %v82, 0.0
    %v94 = vsel %vm72, %v92, 0.0
    %95 = vxpose.xlu0.b32.start [1/16] %v62, 128
    %96 = vxpose.xlu0.b32.cont [2/16] %v63, 128
    %97 = vxpose.xlu0.b32.cont [3/16] 0.0, 128
    %98 = vxpose.xlu0.b32.cont [4/16] 0.0, 128
    %99 = vxpose.xlu0.b32.cont [5/16] 0.0, 128
    %100 = vxpose.xlu0.b32.cont [6/16] 0.0, 128
    %101 = vxpose.xlu0.b32.cont [7/16] 0.0, 128
    %102 = vxpose.xlu0.b32.cont [8/16] 0.0, 128
    %103 = vxpose.xlu0.b32.cont [9/16] 0.0, 128
    %104 = vxpose.xlu0.b32.cont [10/16] 0.0, 128
    %105 = vxpose.xlu0.b32.cont [11/16] 0.0, 128
    %106 = vxpose.xlu0.b32.cont [12/16] 0.0, 128
    %107 = vxpose.xlu0.b32.cont [13/16] 0.0, 128
    %108 = vxpose.xlu0.b32.cont [14/16] 0.0, 128
    %109 = vxpose.xlu0.b32.cont [15/16] 0.0, 128
    %110 = vxpose.xlu0.b32.end [16/16] 0.0, 128
    %v111 = vpop.trf.xlu0
    %v112 = vpop.trf.xlu0
    %v113 = vpop.trf.xlu0
    %v114 = vpop.trf.xlu0
    %v115 = vpop.trf.xlu0
    %v116 = vpop.trf.xlu0
    %v117 = vpop.trf.xlu0
    %v118 = vpop.trf.xlu0
    %v119 = vpop.trf.xlu0
    %v120 = vpop.trf.xlu0
    %v121 = vpop.trf.xlu0
    %v122 = vpop.trf.xlu0
    %v123 = vpop.trf.xlu0
    %v124 = vpop.trf.xlu0
    %v125 = vpop.trf.xlu0
    %v126 = vpop.trf.xlu0
    %v128 = vsel %vm64, %v111, 0
    %v131 = vsel %vm64, %v112, 0
    %133 = vmatpush.msra.mxu0 0.0
    %134 = vmatpush.msra.mxu0 0.0
    %135 = vmatpush.msra.mxu0 0.0
    %136 = vmatpush.msra.mxu0 0.0
    %137 = vmatpush.msra.mxu0 0.0
    %138 = vmatpush.msra.mxu0 0.0
    %139 = vmatpush.msra.mxu0 0.0
    %140 = vmatpush.msra.mxu0 0.0
    %141 = vmatpush.msra.mxu0 0.0
    %142 = vmatpush.msra.mxu0 0.0
    %143 = vmatpush.msra.mxu0 0.0
    %144 = vmatpush.msra.mxu0 0.0
    %145 = vmatpush.msra.mxu0 0.0
    %146 = vmatpush.msra.mxu0 0.0
    %147 = vmatpush.msra.mxu0 %v94
    %148 = vmatpush.msra.mxu0 %v93
    %149 = vmatmul.f32.gmra.mxu0 %v128
    %v150 = vpop.f32.mrf.mxu0
    %v151 = vadd.f32 0.0, %v150
    %152 = vmatmul.f32.gmra.mxu0 %v131
    %v153 = vpop.f32.mrf.mxu0
    %v154 = vadd.f32 0.0, %v153
    %155 = vdwg.mxu0
    %v156 = vmul.f32 %v93, %v151
    %v157 = vmul.f32 %v94, %v154
    %vm158 = vcmp.gt.f32.partialorder %v156, 0.0
    %vm159 = vcmp.gt.f32.partialorder %v157, 0.0
    %v160 = vrsqrt.pop %v156
    %v161 = vmul.f32 %v160, %v156
    %v162 = vmul.f32 %v161, %v160
    %v163 = vmul.f32 0.5, %v162
    %v164 = vsub.f32 1.5, %v163
    %v165 = vmul.f32 %v160, %v164
    %vm166 = vweird.f32 %v156
    %vm167 = vweird.f32 %v160
    %vm168 = vmor %vm166, %vm167
    %v169 = vsel %vm168, %v160, %v165
    %v170 = vrsqrt.pop %v157
    %v171 = vmul.f32 %v170, %v157
    %v172 = vmul.f32 %v171, %v170
    %v173 = vmul.f32 0.5, %v172
    %v174 = vsub.f32 1.5, %v173
    %v175 = vmul.f32 %v170, %v174
    %vm176 = vweird.f32 %v157
    %vm177 = vweird.f32 %v170
    %vm178 = vmor %vm176, %vm177
    %v179 = vsel %vm178, %v170, %v175
    %v180 = vsel %vm158, %v169, 0.0
    %v181 = vsel %vm159, %v179, 0.0
    %v182 = vmul.f32 %v93, %v180
    %v183 = vmul.f32 %v94, %v181
    %v184 = vld [vmem:[#allocation2] sm:$0xff]
    %v185 = vld [vmem:[#allocation2 + $0x8] sm:$0xff]
    %vm186 = vcmask 64512
    %v188 = vsel %vm186, %v53, 0
    %v191 = vsel %vm186, %v54, 0
    %193 = vmatpush.msra.mxu0 0.0
    %194 = vmatpush.msra.mxu0 0.0
    %195 = vmatpush.msra.mxu0 0.0
    %196 = vmatpush.msra.mxu0 0.0
    %197 = vmatpush.msra.mxu0 0.0
    %198 = vmatpush.msra.mxu0 0.0
    %199 = vmatpush.msra.mxu0 0.0
    %200 = vmatpush.msra.mxu0 0.0
    %201 = vmatpush.msra.mxu0 0.0
    %202 = vmatpush.msra.mxu0 0.0
    %203 = vmatpush.msra.mxu0 0.0
    %204 = vmatpush.msra.mxu0 0.0
    %205 = vmatpush.msra.mxu0 0.0
    %206 = vmatpush.msra.mxu0 0.0
    %207 = vmatpush.msra.mxu0 0.0
    %208 = vmatpush.msra.mxu0 %v184
    %209 = vmatmul.f32.gmra.mxu0 %v188
    %v210 = vpop.f32.mrf.mxu0
    %v211 = vadd.f32 0.0, %v210
    %212 = vmatmul.f32.gmra.mxu0 %v191
    %v213 = vpop.f32.mrf.mxu0
    %v214 = vadd.f32 0.0, %v213
    %215 = vdwg.mxu0
    %216 = vmatpush.msra.mxu0 0.0
    %217 = vmatpush.msra.mxu0 0.0
    %218 = vmatpush.msra.mxu0 0.0
    %219 = vmatpush.msra.mxu0 0.0
    %220 = vmatpush.msra.mxu0 0.0
    %221 = vmatpush.msra.mxu0 0.0
    %222 = vmatpush.msra.mxu0 0.0
    %223 = vmatpush.msra.mxu0 0.0
    %224 = vmatpush.msra.mxu0 0.0
    %225 = vmatpush.msra.mxu0 0.0
    %226 = vmatpush.msra.mxu0 0.0
    %227 = vmatpush.msra.mxu0 0.0
    %228 = vmatpush.msra.mxu0 0.0
    %229 = vmatpush.msra.mxu0 0.0
    %230 = vmatpush.msra.mxu0 0.0
    %231 = vmatpush.msra.mxu0 %v185
    %232 = vmatmul.f32.gmra.mxu0 %v188
    %v233 = vpop.f32.mrf.mxu0
    %v234 = vadd.f32 0.0, %v233
    %235 = vmatmul.f32.gmra.mxu0 %v191
    %v236 = vpop.f32.mrf.mxu0
    %v237 = vadd.f32 0.0, %v236
    %238 = vdwg.mxu0
    %v239 = vld [vmem:[%s3] sm:$0x1]
    %v241 = vperm.slane %v239, 0
    %v243 = vadd.f32 %v234, %v241
    %v244 = vadd.f32 %v237, %v241
    %246 = vset.pattern.permute.xlu0 0
    %247 = vperm.xlu0 %246, %v182
    %v248 = vpop.permute.xlu0 %247
    %251 = vset.pattern.permute.xlu0 0
    %252 = vperm.xlu0 %251, %v183
    %v253 = vpop.permute.xlu0 %252
    %v255 = vmul.f32 %v248, %v211
    %v256 = vmul.f32 %v253, %v214
    %257 = vmatpush.msra.mxu0 0.0
    %258 = vmatpush.msra.mxu0 0.0
    %259 = vmatpush.msra.mxu0 0.0
    %260 = vmatpush.msra.mxu0 0.0
    %261 = vmatpush.msra.mxu0 0.0
    %262 = vmatpush.msra.mxu0 0.0
    %263 = vmatpush.msra.mxu0 0.0
    %264 = vmatpush.msra.mxu0 0.0
    %265 = vmatpush.msra.mxu0 0.0
    %266 = vmatpush.msra.mxu0 0.0
    %267 = vmatpush.msra.mxu0 0.0
    %268 = vmatpush.msra.mxu0 0.0
    %269 = vmatpush.msra.mxu0 0.0
    %270 = vmatpush.msra.mxu0 0.0
    %271 = vmatpush.msra.mxu0 %v256
    %272 = vmatpush.msra.mxu0 %v255
    %273 = vmatmul.f32.gmra.mxu0 %v128
    %v274 = vpop.f32.mrf.mxu0
    %v275 = vadd.f32 0.0, %v274
    %276 = vmatmul.f32.gmra.mxu0 %v131
    %v277 = vpop.f32.mrf.mxu0
    %v278 = vadd.f32 0.0, %v277
    %279 = vdwg.mxu0
    %v280 = vmul.f32 %v248, %v275
    %v281 = vmul.f32 %v253, %v278
    %v282 = vadd.f32 %v280, %v281
    %v283 = vrot.slane %v282, 4
    %v284 = vadd.f32 %v282, %v283
    %v285 = vrot.slane %v284, 2
    %v286 = vadd.f32 %v284, %v285
    %v287 = vrot.slane %v286, 1
    %v288 = vadd.f32 %v286, %v287
    %v289 = vrcp.pop 16.0
    %v290 = vmul.f32 16.0, %v289
    %v291 = vsub.f32 1.0, %v290
    %v292 = vmul.f32 %v289, %v291
    %v293 = vadd.f32 %v289, %v292
    %vm294 = vweird.f32 %v289
    %v295 = vsel %vm294, %v289, %v293
    %v296 = vmul.f32 %v288, %v295
    %v297 = vsub.f32 %v280, %v296
    %v298 = vsub.f32 %v281, %v296
    %v299 = vmul.f32 %v297, %v297
    %v300 = vmul.f32 %v298, %v298
    %v301 = vadd.f32 %v299, %v300
    %v302 = vrot.slane %v301, 4
    %v303 = vadd.f32 %v301, %v302
    %v304 = vrot.slane %v303, 2
    %v305 = vadd.f32 %v303, %v304
    %v306 = vrot.slane %v305, 1
    %v307 = vadd.f32 %v305, %v306
    %v308 = vmul.f32 %v307, %v295
    %v309 = vadd.f32 %v308, 1e-05
    %v310 = vrsqrt.pop %v309
    %v311 = vmul.f32 %v310, %v309
    %v312 = vmul.f32 %v311, %v310
    %v313 = vmul.f32 0.5, %v312
    %v314 = vsub.f32 1.5, %v313
    %v315 = vmul.f32 %v310, %v314
    %vm316 = vweird.f32 %v309
    %vm317 = vweird.f32 %v310
    %vm318 = vmor %vm316, %vm317
    %v319 = vsel %vm318, %v310, %v315
    %v320 = vmul.f32 %v297, %v319
    %v321 = vmul.f32 %v298, %v319
    %vm322 = vcmp.ge.f32.partialorder %v320, 0.0
    %vm323 = vcmp.ge.f32.partialorder %v321, 0.0
    %v324 = vmul.f32 %v320, 0.1
    %v325 = vmul.f32 %v321, 0.1
    %v326 = vsel %vm322, %v320, %v324
    %v327 = vsel %vm323, %v321, %v325
    %v328 = vld [vmem:[#allocation5] sm:$0xff]
    %v329 = vld [vmem:[#allocation5 + $0x8] sm:$0xff]
    %vm330 = vcmp.ge.f32.partialorder %v328, 0.1
    %vm331 = vcmp.ge.f32.partialorder %v329, 0.1
    %v332 = vmul.f32 %v326, 1.1111112
    %v333 = vmul.f32 %v327, 1.1111112
    %v334 = vsel %vm330, %v332, 0.0
    %v335 = vsel %vm331, %v333, 0.0
    %v336 = vadd.f32 %v334, %v243
    %v337 = vadd.f32 %v335, %v244
    %vm338 = vcmp.ge.f32.partialorder %v336, 0.0
    %vm339 = vcmp.ge.f32.partialorder %v337, 0.0
    %v340 = vmul.f32 %v336, 0.1
    %v341 = vmul.f32 %v337, 0.1
    %v342 = vsel %vm338, %v336, %v340
    %v343 = vsel %vm339, %v337, %v341
    %344 = vst [vmem:[#allocation7] sm:$0xff] %v342
    %345 = vst [vmem:[#allocation7 + $0x8] sm:$0xff] %v343
    // Predicated region
    $region30: #{tpu_custom_call.1} parent=1 // pred_check
      _
    $region31: #{tpu_custom_call.1} parent=1 // pred_check_branch
      %347 = sbr.rel (0) target = $region33
    $region32: #{tpu_custom_call.1} parent=1 // pred_region
      %349 = vsyncadd [#allocation4], 0
      %s350 = sshll.u32 [#allocation7], 4
      %s351 = int_to_ptr.vmem [resolvable:$true] %s350
      %s352 = sshll.u32 %s5, 4
      %s353 = int_to_ptr.hbm [resolvable:$true] %s352
      %358 = dma.vmem_to_hbm [thread:$0]  %s351, 256, %s353, [#allocation4], 128, 128, 8
    $region33: #{tpu_custom_call.1} parent=1 // pred_fallthru
      _
    // Predicated region
    $region34: #{tpu_custom_call.1} parent=1 // pred_check
      _
    $region35: #{tpu_custom_call.1} parent=1 // pred_check_branch
      %360 = sbr.rel (0) target = $region37
    $region36: #{tpu_custom_call.1} parent=1 // pred_region
      %362 = dma.done [#allocation4], 256
    $region37: #{tpu_custom_call.1} parent=1 // pred_fallthru
      _
    %363 = vsyncpa [#allocation3], 1
    %364 = vsyncpa [#allocation6], 1
    %365 = vsyncpa [#allocation4], 1

</llo_original>
